<compile_context>
chip_gen: v7x
topology: tpu7x:2x2x1
jax: 0.10.0
libtpu: 0.0.40
codegen_flags: <defaults>
</compile_context>

<pallas_src>
import functools

import jax
import jax.numpy as jnp
from jax.experimental import pallas as pl
from jax.experimental.pallas import tpu as pltpu

LANE = 128
NEG_BIG = -1e30  # logit padding value -> exp underflows to exactly 0


def _policy_kernel(num_actions, emit_probs, x_ref, w_ref, b_ref, u_ref, *out_refs):
    if emit_probs:
        probs_ref, act_ref, logp_ref = out_refs
    else:
        act_ref, logp_ref = out_refs
        probs_ref = None

    tile_b = x_ref.shape[0]
    a_pad = w_ref.shape[1]

    # ---- forward(): logits = x @ W + b (bf16 operands, f32 acc), softmax f32 --
    logits = jnp.dot(x_ref[...], w_ref[...],
                     preferred_element_type=jnp.float32) + b_ref[...]
    m = jnp.max(logits, axis=-1, keepdims=True)
    e = jnp.exp(logits - m)
    denom = jnp.sum(e, axis=-1, keepdims=True)
    # Exact reciprocal (VALU/Newton path). approx=True would use the EUP slot
    # but introduces ~1e-3 relative error into probs / CDF boundaries.
    inv = pl.reciprocal(denom, approx=False)
    probs = e * inv
    if probs_ref is not None:
        probs_ref[...] = probs

    # ---- get_action(): inverse-CDF multinomial, done in transposed
    # (action-major) space so per-row scalars land lane-major (batch on lanes)
    # and each grid step stores a single (1, TILE_B) row. ----------------------
    probs_t = jnp.transpose(probs)                      # (A_pad, TILE_B), XLU
    r_i = jax.lax.broadcasted_iota(jnp.int32, (a_pad, a_pad), 0)
    c_i = jax.lax.broadcasted_iota(jnp.int32, (a_pad, a_pad), 1)
    ltri = (c_i <= r_i).astype(jnp.float32)             # lower-tri incl. diag, in-kernel
    # cumsum along actions as an MXU matmul: cdf_t[a, r] = sum_{a'<=a} probs[r, a']
    cdf_t = jnp.dot(ltri, probs_t, preferred_element_type=jnp.float32)

    u_row = u_ref[...].reshape(1, tile_b)               # (1, TILE_B) uniform(0,1)
    # first index with cdf >= u  <=>  count of entries with cdf < u
    chosen = jnp.sum((cdf_t < u_row).astype(jnp.float32),
                     axis=0, keepdims=True).astype(jnp.int32)
    chosen = jnp.minimum(chosen, num_actions - 1)       # clamp to real actions

    # gathered probability -> log, matching torch.log(torch.gather(probs, 1, a))
    a_iota = jax.lax.broadcasted_iota(jnp.int32, (a_pad, tile_b), 0)
    prob_sel = jnp.sum(jnp.where(a_iota == chosen, probs_t, 0.0),
                       axis=0, keepdims=True)           # (1, TILE_B)
    logp = jnp.log(prob_sel)

    act_ref[...] = chosen.reshape(act_ref.shape)
    logp_ref[...] = logp.reshape(logp_ref.shape)


def policy_get_action(state, w, b, uniform, *, tile_b=512, return_probs=True):
    """forward + get_action in a single batch-tiled Pallas call.

    state:   (B, D) float32
    w:       (D, A) float32
    b:       (1, A) float32
    uniform: (B, 1) float32 in [0, 1) — randomness for multinomial sampling
    returns: (action_probs (B, A), actions (B,), log_probs (B,)) if return_probs
             else (actions (B,), log_probs (B,))
    """
    B, D = state.shape
    A = w.shape[1]

    def rup(x, m):
        return ((x + m - 1) // m) * m

    TILE_B = min(tile_b, rup(B, 16))       # 16-row aligned (bf16 sublane tile)
    # v7x megacore: keep >= 2 grid steps when the batch allows it so the
    # "parallel" axis shards across both TensorCores.
    if rup(B, TILE_B) // TILE_B < 2 and TILE_B >= 32:
        TILE_B = rup(TILE_B // 2, 16)
    B_pad = rup(B, TILE_B)
    num_tiles = B_pad // TILE_B
    D_pad = rup(D, LANE)                   # lane-aligned MXU K dim
    A_pad = rup(A, LANE)                   # lane-dense action dim

    # Pad only when misaligned. Zero/-1e30 padding keeps semantics exact:
    # padded features contribute 0 to logits, padded actions get prob exactly 0.
    if B == B_pad and D == D_pad:
        x_p = state.astype(jnp.bfloat16)
    else:
        x_p = jnp.zeros((B_pad, D_pad), jnp.bfloat16).at[:B, :D].set(
            state.astype(jnp.bfloat16))
    if D == D_pad and A == A_pad:
        w_p = w.astype(jnp.bfloat16)
    else:
        w_p = jnp.zeros((D_pad, A_pad), jnp.bfloat16).at[:D, :A].set(
            w.astype(jnp.bfloat16))
    if A == A_pad:
        b_p = b.astype(jnp.float32)
    else:
        b_p = jnp.full((1, A_pad), NEG_BIG, jnp.float32).at[:, :A].set(b)
    if B == B_pad:
        u_p = uniform.astype(jnp.float32).reshape(num_tiles, 1, TILE_B)
    else:
        u_flat = jnp.full((B_pad,), 0.5, jnp.float32).at[:B].set(uniform[:, 0])
        u_p = u_flat.reshape(num_tiles, 1, TILE_B)

    # Output shapes / specs (probs optional).
    out_shape = []
    out_specs = []
    if return_probs:
        out_shape.append(jax.ShapeDtypeStruct((B_pad, A_pad), jnp.float32))
        out_specs.append(pl.BlockSpec((TILE_B, A_pad), lambda i: (i, 0)))
    out_shape += [
        jax.ShapeDtypeStruct((num_tiles, 1, TILE_B), jnp.int32),     # actions
        jax.ShapeDtypeStruct((num_tiles, 1, TILE_B), jnp.float32),   # log-probs
    ]
    out_specs += [pl.BlockSpec((1, 1, TILE_B), lambda i: (i, 0, 0))] * 2

    # Scoped-VMEM budget: block buffers + the f32 temporaries of the tile.
    probs_out_bytes = (TILE_B * A_pad * 4) if return_probs else 0
    est = (2 * TILE_B * D_pad * 2            # state blocks (bf16, double-buffered)
           + 2 * D_pad * A_pad * 2           # W (bf16)
           + 2 * A_pad * 4                   # bias
           + 2 * TILE_B * 4                  # uniform rows
           + 2 * probs_out_bytes             # probs writeback blocks
           + 4 * TILE_B * 4                  # action / log-prob rows
           + 8 * TILE_B * A_pad * 4          # f32 temporaries (logits/e/probs/cdf/...)
           + A_pad * A_pad * 4)              # in-kernel tri
    vmem_limit = int(min(max(32 << 20, 2 * est), 56 << 20))

    kernel = functools.partial(_policy_kernel, A, return_probs)

    outs = pl.pallas_call(
        kernel,
        out_shape=tuple(out_shape),
        grid_spec=pl.GridSpec(
            grid=(num_tiles,),
            in_specs=[
                pl.BlockSpec((TILE_B, D_pad), lambda i: (i, 0)),     # state tile
                pl.BlockSpec((D_pad, A_pad), lambda i: (0, 0)),      # W (resident)
                pl.BlockSpec((1, A_pad), lambda i: (0, 0)),          # bias (resident)
                pl.BlockSpec((1, 1, TILE_B), lambda i: (i, 0, 0)),   # uniform row
            ],
            out_specs=out_specs,
        ),
        compiler_params=pltpu.CompilerParams(
            dimension_semantics=("parallel",),     # megacore batch split on v7x
            vmem_limit_bytes=vmem_limit),
    )(x_p, w_p, b_p, u_p)

    if return_probs:
        probs_p, act_p, logp_p = outs
    else:
        act_p, logp_p = outs

    actions = act_p.reshape(B_pad)[:B]          # contiguous strip
    log_probs = logp_p.reshape(B_pad)[:B]
    if return_probs:
        return probs_p[:B, :A], actions, log_probs
    return actions, log_probs


if __name__ == "__main__":
    B, D, A = 8, 32, 16   # batch, state-dim, action-dim

    key = jax.random.PRNGKey(0)
    k_state, k_w, k_b, k_u = jax.random.split(key, 4)

    # Deterministic synthetic parameters (no checkpoint loading).
    state = jax.random.normal(k_state, (B, D), dtype=jnp.float32)
    w = jax.random.normal(k_w, (D, A), dtype=jnp.float32) * 0.1
    b = jax.random.normal(k_b, (1, A), dtype=jnp.float32) * 0.01
    uniform = jax.random.uniform(k_u, (B, 1), dtype=jnp.float32)

    probs, actions, log_probs = policy_get_action(state, w, b, uniform)
    jax.block_until_ready((probs, actions, log_probs))

    # Sanity checks against a plain-JAX reference using the same bf16 MXU
    # operands (softmax / CDF in f32, like the kernel).
    ref_logits = jnp.dot(state.astype(jnp.bfloat16), w.astype(jnp.bfloat16),
                         preferred_element_type=jnp.float32) + b
    ref_probs = jax.nn.softmax(ref_logits, axis=-1)
    assert jnp.allclose(probs, ref_probs, atol=1e-5), "probs mismatch"
    ref_cdf = jnp.cumsum(ref_probs, axis=-1)
    ref_actions = jnp.minimum(
        jnp.sum((ref_cdf < uniform).astype(jnp.int32), axis=-1), A - 1)
    assert jnp.array_equal(actions, ref_actions), "actions mismatch"
    ref_logp = jnp.log(jnp.take_along_axis(ref_probs, ref_actions[:, None], 1))[:, 0]
    assert jnp.allclose(log_probs, ref_logp, atol=1e-5), "log_probs mismatch"

    # Exercise the probs-free fast path used by BasePolicy.get_action.
    a2, lp2 = policy_get_action(state, w, b, uniform, return_probs=False)
    jax.block_until_ready((a2, lp2))
    assert jnp.array_equal(a2, actions) and jnp.allclose(lp2, log_probs, atol=1e-6)

    # TODO(synk): save()/load() (torch state_dict serialization) has no Pallas
    # equivalent and is intentionally omitted.
    print("KERNEL_OK")
</pallas_src>

<mosaic_0001>
module attributes {stable_mosaic.version = 11 : i64} {
  func.func @_policy_kernel(%arg0: i32, %arg1: memref<16x128xbf16, #tpu.memory_space<vmem>>, %arg2: memref<128x128xbf16, #tpu.memory_space<vmem>>, %arg3: memref<1x128xf32, #tpu.memory_space<vmem>>, %arg4: memref<1x1x16xf32, #tpu.memory_space<vmem>>, %arg5: memref<16x128xf32, #tpu.memory_space<vmem>>, %arg6: memref<1x1x16xi32, #tpu.memory_space<vmem>>, %arg7: memref<1x1x16xf32, #tpu.memory_space<vmem>>) attributes {dimension_semantics = [#tpu.dimension_semantics<parallel>], iteration_bounds = array<i64: 1>, scalar_prefetch = 0 : i64, scratch_operands = 0 : i64, tpu.core_type = #tpu.core_type<tc>, window_params = [{transform_indices = @transform_0, window_bounds = array<i64: 16, 128>}, {pipeline_mode = #tpu.pipeline_mode<synchronous>, transform_indices = @transform_1, window_bounds = array<i64: 128, 128>}, {pipeline_mode = #tpu.pipeline_mode<synchronous>, transform_indices = @transform_2, window_bounds = array<i64: 1, 128>}, {transform_indices = @transform_3, window_bounds = array<i64: 1, 1, 16>}, {transform_indices = @transform_4, window_bounds = array<i64: 16, 128>}, {transform_indices = @transform_5, window_bounds = array<i64: 1, 1, 16>}, {transform_indices = @transform_6, window_bounds = array<i64: 1, 1, 16>}]} {
    %c0 = arith.constant 0 : index
    %c0_0 = arith.constant 0 : index
    %0 = vector.load %arg1[%c0, %c0_0] : memref<16x128xbf16, #tpu.memory_space<vmem>>, vector<16x128xbf16>
    %c0_1 = arith.constant 0 : index
    %c0_2 = arith.constant 0 : index
    %1 = vector.load %arg2[%c0_1, %c0_2] : memref<128x128xbf16, #tpu.memory_space<vmem>>, vector<128x128xbf16>
    %cst = arith.constant dense<0.000000e+00> : vector<16x128xf32>
    %2 = tpu.matmul %0, %1, %cst {dimension_numbers = #tpu.dot_dimension_numbers<[1], [0], [0], [1], [0, 0, 1, 1], [], []>} : vector<16x128xbf16>, vector<128x128xbf16>, vector<16x128xf32> -> vector<16x128xf32>
    %c0_3 = arith.constant 0 : index
    %c0_4 = arith.constant 0 : index
    %3 = vector.load %arg3[%c0_3, %c0_4] : memref<1x128xf32, #tpu.memory_space<vmem>>, vector<1x128xf32>
    %4 = vector.broadcast %3 : vector<1x128xf32> to vector<16x128xf32>
    %5 = arith.addf %2, %4 : vector<16x128xf32>
    %cst_5 = arith.constant dense<0xFF800000> : vector<16xf32>
    %6 = vector.multi_reduction <maximumf>, %5, %cst_5 [1] : vector<16x128xf32> to vector<16xf32>
    %7 = vector.shape_cast %6 : vector<16xf32> to vector<16x1xf32>
    %8 = vector.broadcast %7 : vector<16x1xf32> to vector<16x128xf32>
    %9 = arith.subf %5, %8 : vector<16x128xf32>
    %10 = math.exp %9 : vector<16x128xf32>
    %cst_6 = arith.constant dense<0.000000e+00> : vector<16xf32>
    %11 = vector.multi_reduction <add>, %10, %cst_6 [1] : vector<16x128xf32> to vector<16xf32>
    %12 = vector.shape_cast %11 : vector<16xf32> to vector<16x1xf32>
    %13 = tpu.reciprocal %12 : vector<16x1xf32> -> vector<16x1xf32>
    %14 = vector.broadcast %13 : vector<16x1xf32> to vector<16x128xf32>
    %15 = arith.mulf %10, %14 : vector<16x128xf32>
    %c0_7 = arith.constant 0 : index
    %c0_8 = arith.constant 0 : index
    %16 = vector.load %arg5[%c0_7, %c0_8] : memref<16x128xf32, #tpu.memory_space<vmem>>, vector<16x128xf32>
    tpu.vector_store %arg5[%c0_7, %c0_8], %15 {strides = array<i32>} : memref<16x128xf32, #tpu.memory_space<vmem>>, vector<16x128xf32>,
    %17 = tpu.transpose %15, [1, 0] : vector<16x128xf32> -> vector<128x16xf32>
    %18 = tpu.iota {dimensions = array<i32: 0>} : vector<128x128xi32>
    %19 = tpu.iota {dimensions = array<i32: 1>} : vector<128x128xi32>
    %20 = arith.cmpi sle, %19, %18 : vector<128x128xi32>
    %21 = arith.extui %20 : vector<128x128xi1> to vector<128x128xi32>
    %22 = arith.sitofp %21 : vector<128x128xi32> to vector<128x128xf32>
    %cst_9 = arith.constant dense<0.000000e+00> : vector<128x16xf32>
    %23 = tpu.matmul %22, %17, %cst_9 {dimension_numbers = #tpu.dot_dimension_numbers<[1], [0], [0], [1], [0, 0, 1, 1], [], []>} : vector<128x128xf32>, vector<128x16xf32>, vector<128x16xf32> -> vector<128x16xf32>
    %c0_10 = arith.constant 0 : index
    %c0_11 = arith.constant 0 : index
    %c0_12 = arith.constant 0 : index
    %24 = vector.load %arg4[%c0_10, %c0_11, %c0_12] : memref<1x1x16xf32, #tpu.memory_space<vmem>>, vector<1x1x16xf32>
    %25 = vector.shape_cast %24 : vector<1x1x16xf32> to vector<1x16xf32>
    %26 = vector.broadcast %25 : vector<1x16xf32> to vector<128x16xf32>
    %27 = arith.cmpf olt, %23, %26 : vector<128x16xf32>
    %28 = arith.extui %27 : vector<128x16xi1> to vector<128x16xi32>
    %29 = arith.sitofp %28 : vector<128x16xi32> to vector<128x16xf32>
    %cst_13 = arith.constant dense<0.000000e+00> : vector<16xf32>
    %30 = vector.multi_reduction <add>, %29, %cst_13 [0] : vector<128x16xf32> to vector<16xf32>
    %31 = vector.shape_cast %30 : vector<16xf32> to vector<1x16xf32>
    %32 = arith.fptosi %31 : vector<1x16xf32> to vector<1x16xi32>
    %c15_i32 = arith.constant 15 : i32
    %33 = vector.broadcast %c15_i32 : i32 to vector<1x16xi32>
    %34 = arith.minsi %32, %33 : vector<1x16xi32>
    %35 = tpu.iota {dimensions = array<i32: 0>} : vector<128x16xi32>
    %36 = vector.broadcast %34 : vector<1x16xi32> to vector<128x16xi32>
    %37 = arith.cmpi eq, %35, %36 : vector<128x16xi32>
    %cst_14 = arith.constant 0.000000e+00 : f32
    %38 = vector.broadcast %cst_14 : f32 to vector<128x16xf32>
    %39 = arith.select %37, %17, %38 : vector<128x16xi1>, vector<128x16xf32>
    %cst_15 = arith.constant dense<0.000000e+00> : vector<16xf32>
    %40 = vector.multi_reduction <add>, %39, %cst_15 [0] : vector<128x16xf32> to vector<16xf32>
    %41 = vector.shape_cast %40 : vector<16xf32> to vector<1x16xf32>
    %42 = math.log %41 : vector<1x16xf32>
    %43 = vector.shape_cast %34 : vector<1x16xi32> to vector<1x1x16xi32>
    %c0_16 = arith.constant 0 : index
    %c0_17 = arith.constant 0 : index
    %c0_18 = arith.constant 0 : index
    %44 = vector.load %arg6[%c0_16, %c0_17, %c0_18] : memref<1x1x16xi32, #tpu.memory_space<vmem>>, vector<1x1x16xi32>
    tpu.vector_store %arg6[%c0_16, %c0_17, %c0_18], %43 {strides = array<i32>} : memref<1x1x16xi32, #tpu.memory_space<vmem>>, vector<1x1x16xi32>,
    %45 = vector.shape_cast %42 : vector<1x16xf32> to vector<1x1x16xf32>
    %c0_19 = arith.constant 0 : index
    %c0_20 = arith.constant 0 : index
    %c0_21 = arith.constant 0 : index
    %46 = vector.load %arg7[%c0_19, %c0_20, %c0_21] : memref<1x1x16xf32, #tpu.memory_space<vmem>>, vector<1x1x16xf32>
    tpu.vector_store %arg7[%c0_19, %c0_20, %c0_21], %45 {strides = array<i32>} : memref<1x1x16xf32, #tpu.memory_space<vmem>>, vector<1x1x16xf32>,
    return
  }
  func.func @transform_0(%arg0: i32) -> (i32, i32) {
    %c0_i32 = arith.constant 0 : i32
    %c0_i32_0 = arith.constant 0 : i32
    return %arg0, %c0_i32 : i32, i32
  }
  func.func @transform_1(%arg0: i32) -> (i32, i32) {
    %c0_i32 = arith.constant 0 : i32
    %c0_i32_0 = arith.constant 0 : i32
    %c0_i32_1 = arith.constant 0 : i32
    return %c0_i32, %c0_i32_0 : i32, i32
  }
  func.func @transform_2(%arg0: i32) -> (i32, i32) {
    %c0_i32 = arith.constant 0 : i32
    %c0_i32_0 = arith.constant 0 : i32
    %c0_i32_1 = arith.constant 0 : i32
    return %c0_i32, %c0_i32_0 : i32, i32
  }
  func.func @transform_3(%arg0: i32) -> (i32, i32, i32) {
    %c0_i32 = arith.constant 0 : i32
    %c0_i32_0 = arith.constant 0 : i32
    %c0_i32_1 = arith.constant 0 : i32
    return %arg0, %c0_i32, %c0_i32_0 : i32, i32, i32
  }
  func.func @transform_4(%arg0: i32) -> (i32, i32) {
    %c0_i32 = arith.constant 0 : i32
    %c0_i32_0 = arith.constant 0 : i32
    return %arg0, %c0_i32 : i32, i32
  }
  func.func @transform_5(%arg0: i32) -> (i32, i32, i32) {
    %c0_i32 = arith.constant 0 : i32
    %c0_i32_0 = arith.constant 0 : i32
    %c0_i32_1 = arith.constant 0 : i32
    return %arg0, %c0_i32, %c0_i32_0 : i32, i32, i32
  }
  func.func @transform_6(%arg0: i32) -> (i32, i32, i32) {
    %c0_i32 = arith.constant 0 : i32
    %c0_i32_0 = arith.constant 0 : i32
    %c0_i32_1 = arith.constant 0 : i32
    return %arg0, %c0_i32, %c0_i32_0 : i32, i32, i32
  }
}

</mosaic_0001>

<llo_original>
// kernel: tpu_custom_call.1
$region0: #{tpu_custom_call.1}
  #allocation0 [shape = 'u32[]', space=smem, size = 0x4, offset = 0x4, fixed_abs, tag = 'smem constant byte address 0x4 - core index']
  #allocation1 [shape = 'u32[144,128]{1,0:T(1,128)}', space=vmem, size = 0x12000, scoped, tag = 'internal scratch']
  %s0 = inlined_call_operand.hbm [shape: bf16[16,128], index: 0, kind: input, shape index: {}]
  %s1 = inlined_call_operand.hbm [shape: bf16[128,128], index: 1, kind: input, shape index: {}]
  %s2 = inlined_call_operand.vmem [shape: f32[1,128], index: 2, kind: input, shape index: {}]
  %s3 = inlined_call_operand.vmem [shape: f32[1,1,16], index: 3, kind: input, shape index: {}]
  %s4 = inlined_call_operand.hbm [shape: f32[16,128], index: 4, kind: output, shape index: {0}]
  %s5 = inlined_call_operand.hbm [shape: s32[1,1,16], index: 5, kind: output, shape index: {1}]
  %s6 = inlined_call_operand.hbm [shape: f32[1,1,16], index: 6, kind: output, shape index: {2}]
  %7 = xla_tuple %s4, %s5, %s6
  %s8 = sld [smem:[#allocation0]]
  $region50: #{tpu_custom_call.1} parent=0
    _
  %s10 = ssub.s32 1, %s8
  %s11 = scalar_select 0, %s10, %s8
  $region1: #{tpu_custom_call.1} parent=0
    #allocation2 [shape = 'u8[4096]{0}', space=vmem, size = 0x1000, scoped, tag = 'input window, operand 0, single buffered']
    #allocation3 [shape = 's32[1]{0}', space=sflag, size = 0x4, scoped, tag = 'scoped memory for tpu_custom_call.1']
    #allocation4 [shape = 's32[1]{0}', space=sflag, size = 0x4, scoped, tag = 'scoped memory for tpu_custom_call.1']
    #allocation5 [shape = 'u8[32768]{0}', space=vmem, size = 0x8000, scoped, tag = 'input window, operand 1, single buffered']
    #allocation6 [shape = 's32[1]{0}', space=sflag, size = 0x4, scoped, tag = 'scoped memory for tpu_custom_call.1']
    #allocation7 [shape = 'u8[8192]{0}', space=vmem, size = 0x2000, scoped, tag = 'output window, operand 0, single buffered']
    #allocation8 [shape = 'u8[512]{0}', space=vmem, size = 0x400, scoped, tag = 'output window, operand 1, single buffered']
    #allocation9 [shape = 's32[1]{0}', space=sflag, size = 0x4, scoped, tag = 'scoped memory for tpu_custom_call.1']
    #allocation10 [shape = 'u8[512]{0}', space=vmem, size = 0x400, scoped, tag = 'output window, operand 2, single buffered']
    %12 = vsyncpa [#allocation3], 0
    %13 = vsyncpa [#allocation6], 0
    %14 = vsyncpa [#allocation4], 0
    %15 = vsyncpa [#allocation9], 0
    // Predicated region
    $region2: #{tpu_custom_call.1} parent=1 // pred_check
      _
    $region3: #{tpu_custom_call.1} parent=1 // pred_check_branch
      %17 = sbr.rel (0) target = $region5
    $region4: #{tpu_custom_call.1} parent=1 // pred_region
      %s19 = ssub.s32 128, 128
      %20 = vsyncadd [#allocation3], %s19
      %s21 = sshll.u32 [#allocation2], 4
      %s22 = int_to_ptr.vmem [resolvable:$true] %s21
      %27 = dma.hbm_to_vmem [thread:$0]  %s0, 128, %s22, [#allocation3], 64, 64, 4
    $region5: #{tpu_custom_call.1} parent=1 // pred_fallthru
      _
    // Predicated region
    $region6: #{tpu_custom_call.1} parent=1 // pred_check
      _
    $region7: #{tpu_custom_call.1} parent=1 // pred_check_branch
      %29 = sbr.rel (0) target = $region9
    $region8: #{tpu_custom_call.1} parent=1 // pred_region
      %s31 = ssub.s32 1024, 1024
      %32 = vsyncadd [#allocation6], %s31
      %s33 = sshll.u32 [#allocation5], 4
      %s34 = int_to_ptr.vmem [resolvable:$true] %s33
      %39 = dma.hbm_to_vmem [thread:$0]  %s1, 1024, %s34, [#allocation6], 64, 64, 4
    $region9: #{tpu_custom_call.1} parent=1 // pred_fallthru
      _
    // Predicated region
    $region10: #{tpu_custom_call.1} parent=1 // pred_check
      _
    $region11: #{tpu_custom_call.1} parent=1 // pred_check_branch
      %41 = sbr.rel (0) target = $region13
    $region12: #{tpu_custom_call.1} parent=1 // pred_region
      _
    $region13: #{tpu_custom_call.1} parent=1 // pred_fallthru
      _
    // Predicated region
    $region14: #{tpu_custom_call.1} parent=1 // pred_check
      _
    $region15: #{tpu_custom_call.1} parent=1 // pred_check_branch
      %43 = sbr.rel (0) target = $region17
    $region16: #{tpu_custom_call.1} parent=1 // pred_region
      _
    $region17: #{tpu_custom_call.1} parent=1 // pred_fallthru
      _
    // Predicated region
    $region18: #{tpu_custom_call.1} parent=1 // pred_check
      _
    $region19: #{tpu_custom_call.1} parent=1 // pred_check_branch
      %45 = sbr.rel (0) target = $region21
    $region20: #{tpu_custom_call.1} parent=1 // pred_region
      %46 = dma.done [#allocation3], 128
    $region21: #{tpu_custom_call.1} parent=1 // pred_fallthru
      _
    // Predicated region
    $region22: #{tpu_custom_call.1} parent=1 // pred_check
      _
    $region23: #{tpu_custom_call.1} parent=1 // pred_check_branch
      %48 = sbr.rel (0) target = $region25
    $region24: #{tpu_custom_call.1} parent=1 // pred_region
      %49 = dma.done [#allocation6], 1024
    $region25: #{tpu_custom_call.1} parent=1 // pred_fallthru
      _
    %v51 = vld [vmem:[#allocation2] sm:$0xf]
    %v52 = vld [vmem:[#allocation2 + $0x4] sm:$0xf]
    %v53 = vld [vmem:[#allocation5] sm:$0xf]
    %v54 = vld [vmem:[#allocation5 + $0x4] sm:$0xf]
    %v55 = vld [vmem:[#allocation5 + $0x8] sm:$0xf]
    %v56 = vld [vmem:[#allocation5 + $0xc] sm:$0xf]
    %v57 = vld [vmem:[#allocation5 + $0x10] sm:$0xf]
    %v58 = vld [vmem:[#allocation5 + $0x14] sm:$0xf]
    %v59 = vld [vmem:[#allocation5 + $0x18] sm:$0xf]
    %v60 = vld [vmem:[#allocation5 + $0x1c] sm:$0xf]
    %v61 = vld [vmem:[#allocation5 + $0x20] sm:$0xf]
    %v62 = vld [vmem:[#allocation5 + $0x24] sm:$0xf]
    %v63 = vld [vmem:[#allocation5 + $0x28] sm:$0xf]
    %v64 = vld [vmem:[#allocation5 + $0x2c] sm:$0xf]
    %v65 = vld [vmem:[#allocation5 + $0x30] sm:$0xf]
    %v66 = vld [vmem:[#allocation5 + $0x34] sm:$0xf]
    %v67 = vld [vmem:[#allocation5 + $0x38] sm:$0xf]
    %v68 = vld [vmem:[#allocation5 + $0x3c] sm:$0xf]
    %v69 = vld [vmem:[%s2] sm:$0x1]
    %v71 = vlaneseq
    %v72 = vshrl.u32 %v71, 7
    %v73 = vsub.s32 0, %v72
    %v74 = vrot.slane %v69, %v73
    %v78 = vunpack.c.l.b16 %v51
    %v79 = vunpack.c.l.b16 %v52
    %v80 = vpack.c.b16 %v79, %v78
    %v98 = vunpack.c.l.b16 %v53
    %v99 = vunpack.c.l.b16 %v54
    %v100 = vunpack.c.l.b16 %v55
    %v101 = vunpack.c.l.b16 %v56
    %v102 = vunpack.c.l.b16 %v57
    %v103 = vunpack.c.l.b16 %v58
    %v104 = vunpack.c.l.b16 %v59
    %v105 = vunpack.c.l.b16 %v60
    %v106 = vunpack.c.l.b16 %v61
    %v107 = vunpack.c.l.b16 %v62
    %v108 = vunpack.c.l.b16 %v63
    %v109 = vunpack.c.l.b16 %v64
    %v110 = vunpack.c.l.b16 %v65
    %v111 = vunpack.c.l.b16 %v66
    %v112 = vunpack.c.l.b16 %v67
    %v113 = vunpack.c.l.b16 %v68
    %v114 = vpack.c.b16 %v99, %v98
    %v115 = vpack.c.b16 %v101, %v100
    %v116 = vpack.c.b16 %v103, %v102
    %v117 = vpack.c.b16 %v105, %v104
    %v118 = vpack.c.b16 %v107, %v106
    %v119 = vpack.c.b16 %v109, %v108
    %v120 = vpack.c.b16 %v111, %v110
    %v121 = vpack.c.b16 %v113, %v112
    %130 = vmatprep.subr.bf16.mxu0 0
    %131 = vmatpush1.bf16.msra.mxu0 %v114
    %132 = vmatprep.subr.bf16.mxu0 0
    %133 = vmatpush1.bf16.msra.mxu0 %v115
    %134 = vmatprep.subr.bf16.mxu0 0
    %135 = vmatpush1.bf16.msra.mxu0 %v116
    %136 = vmatprep.subr.bf16.mxu0 0
    %137 = vmatpush1.bf16.msra.mxu0 %v117
    %138 = vmatprep.subr.bf16.mxu0 0
    %139 = vmatpush1.bf16.msra.mxu0 %v118
    %140 = vmatprep.subr.bf16.mxu0 0
    %141 = vmatpush1.bf16.msra.mxu0 %v119
    %142 = vmatprep.subr.bf16.mxu0 0
    %143 = vmatpush1.bf16.msra.mxu0 %v120
    %144 = vmatprep.subr.bf16.mxu0 0
    %145 = vmatpush1.bf16.msra.mxu0 %v121
    %146 = vmatprep.subr.bf16.mxu0 0
    %147 = vmatpush1.bf16.msra.mxu0 0
    %148 = vmatprep.subr.bf16.mxu0 0
    %149 = vmatpush1.bf16.msra.mxu0 0
    %150 = vmatprep.subr.bf16.mxu0 0
    %151 = vmatpush1.bf16.msra.mxu0 0
    %152 = vmatprep.subr.bf16.mxu0 0
    %153 = vmatpush1.bf16.msra.mxu0 0
    %154 = vmatprep.subr.bf16.mxu0 0
    %155 = vmatpush1.bf16.msra.mxu0 0
    %156 = vmatprep.subr.bf16.mxu0 0
    %157 = vmatpush1.bf16.msra.mxu0 0
    %158 = vmatprep.subr.bf16.mxu0 0
    %159 = vmatpush1.bf16.msra.mxu0 0
    %160 = vmatprep.subr.bf16.mxu0 0
    %161 = vmatpush1.bf16.msra.mxu0 0
    %162 = vmatprep.mubr.bf16.mxu0 0
    %163 = vmatmul.mubr.bf16.gmra.mrb[0].mxu0 %v80
    %v164 = vpop.f32.mrb[0].mxu0
    %v165 = vadd.f32 %v74, %v164
    %v166 = vpop.f32.mrb[0].mxu0
    %v167 = vpop.f32.mrb[0].mxu0
    %v168 = vadd.f32 %v74, %v167
    %v169 = vpop.f32.mrb[0].mxu0
    %170 = vdwg.mxu0
    %171 = vmax.xlane.f32.xlu0 %v165
    %v172 = vpop.xlane.xlu0 %171
    %173 = vmax.xlane.f32.xlu0 %v168
    %v174 = vpop.xlane.xlu0 %173
    %v175 = vsub.f32 %v165, %v172
    %v176 = vsub.f32 %v168, %v174
    %v177 = vmul.f32 %v175, 1.442695
    %v178 = vpow.pop %v177
    %v179 = vmul.f32 %v176, 1.442695
    %v180 = vpow.pop %v179
    %181 = vadd.xlane.f32.xlu0 %v178
    %v182 = vpop.xlane.xlu0 %181
    %183 = vadd.xlane.f32.xlu0 %v180
    %v184 = vpop.xlane.xlu0 %183
    %v185 = vrcp.pop %v182
    %v186 = vrcp.pop %v184
    %v187 = vmul.f32 %v178, %v185
    %v188 = vmul.f32 %v180, %v186
    %189 = vst [vmem:[#allocation7] sm:$0xff] %v187
    %190 = vst [vmem:[#allocation7 + $0x8] sm:$0xff] %v188
    %191 = vxpose.xlu0.b32.start [1/16] %v187, 128
    %192 = vxpose.xlu0.b32.cont [2/16] %v188, 128
    %193 = vxpose.xlu0.b32.cont [3/16] 0.0, 128
    %194 = vxpose.xlu0.b32.cont [4/16] 0.0, 128
    %195 = vxpose.xlu0.b32.cont [5/16] 0.0, 128
    %196 = vxpose.xlu0.b32.cont [6/16] 0.0, 128
    %197 = vxpose.xlu0.b32.cont [7/16] 0.0, 128
    %198 = vxpose.xlu0.b32.cont [8/16] 0.0, 128
    %199 = vxpose.xlu0.b32.cont [9/16] 0.0, 128
    %200 = vxpose.xlu0.b32.cont [10/16] 0.0, 128
    %201 = vxpose.xlu0.b32.cont [11/16] 0.0, 128
    %202 = vxpose.xlu0.b32.cont [12/16] 0.0, 128
    %203 = vxpose.xlu0.b32.cont [13/16] 0.0, 128
    %204 = vxpose.xlu0.b32.cont [14/16] 0.0, 128
    %205 = vxpose.xlu0.b32.cont [15/16] 0.0, 128
    %206 = vxpose.xlu0.b32.end [16/16] 0.0, 128
    %v207 = vpop.trf.xlu0
    %v208 = vpop.trf.xlu0
    %v209 = vpop.trf.xlu0
    %v210 = vpop.trf.xlu0
    %v211 = vpop.trf.xlu0
    %v212 = vpop.trf.xlu0
    %v213 = vpop.trf.xlu0
    %v214 = vpop.trf.xlu0
    %v215 = vpop.trf.xlu0
    %v216 = vpop.trf.xlu0
    %v217 = vpop.trf.xlu0
    %v218 = vpop.trf.xlu0
    %v219 = vpop.trf.xlu0
    %v220 = vpop.trf.xlu0
    %v221 = vpop.trf.xlu0
    %v222 = vpop.trf.xlu0
    %v223 = vlaneseq
    %v224 = vshrl.u32 %v223, 7
    %v225 = vadd.s32 %v224, 8
    %v226 = vadd.s32 %v224, 16
    %v227 = vadd.s32 %v224, 24
    %v228 = vadd.s32 %v224, 32
    %v229 = vadd.s32 %v224, 40
    %v230 = vadd.s32 %v224, 48
    %v231 = vadd.s32 %v224, 56
    %v232 = vadd.s32 %v224, 64
    %v233 = vadd.s32 %v224, 72
    %v234 = vadd.s32 %v224, 80
    %v235 = vadd.s32 %v224, 88
    %v236 = vadd.s32 %v224, 96
    %v237 = vadd.s32 %v224, 104
    %v238 = vadd.s32 %v224, 112
    %v239 = vadd.s32 %v224, 120
    %v240 = vlaneseq
    %v241 = vand.u32 %v240, 127
    %vm242 = vcmp.le.s32.totalorder %v241, %v224
    %vm243 = vcmp.le.s32.totalorder %v241, %v225
    %vm244 = vcmp.le.s32.totalorder %v241, %v226
    %vm245 = vcmp.le.s32.totalorder %v241, %v227
    %vm246 = vcmp.le.s32.totalorder %v241, %v228
    %vm247 = vcmp.le.s32.totalorder %v241, %v229
    %vm248 = vcmp.le.s32.totalorder %v241, %v230
    %vm249 = vcmp.le.s32.totalorder %v241, %v231
    %vm250 = vcmp.le.s32.totalorder %v241, %v232
    %vm251 = vcmp.le.s32.totalorder %v241, %v233
    %vm252 = vcmp.le.s32.totalorder %v241, %v234
    %vm253 = vcmp.le.s32.totalorder %v241, %v235
    %vm254 = vcmp.le.s32.totalorder %v241, %v236
    %vm255 = vcmp.le.s32.totalorder %v241, %v237
    %vm256 = vcmp.le.s32.totalorder %v241, %v238
    %vm257 = vcmp.le.s32.totalorder %v241, %v239
    %v258 = vsel %vm242, 1, 0
    %v259 = vsel %vm243, 1, 0
    %v260 = vsel %vm244, 1, 0
    %v261 = vsel %vm245, 1, 0
    %v262 = vsel %vm246, 1, 0
    %v263 = vsel %vm247, 1, 0
    %v264 = vsel %vm248, 1, 0
    %v265 = vsel %vm249, 1, 0
    %v266 = vsel %vm250, 1, 0
    %v267 = vsel %vm251, 1, 0
    %v268 = vsel %vm252, 1, 0
    %v269 = vsel %vm253, 1, 0
    %v270 = vsel %vm254, 1, 0
    %v271 = vsel %vm255, 1, 0
    %v272 = vsel %vm256, 1, 0
    %v273 = vsel %vm257, 1, 0
    %v274 = vcvt.s32.f32 %v258
    %v275 = vcvt.s32.f32 %v259
    %v276 = vcvt.s32.f32 %v260
    %v277 = vcvt.s32.f32 %v261
    %v278 = vcvt.s32.f32 %v262
    %v279 = vcvt.s32.f32 %v263
    %v280 = vcvt.s32.f32 %v264
    %v281 = vcvt.s32.f32 %v265
    %v282 = vcvt.s32.f32 %v266
    %v283 = vcvt.s32.f32 %v267
    %v284 = vcvt.s32.f32 %v268
    %v285 = vcvt.s32.f32 %v269
    %v286 = vcvt.s32.f32 %v270
    %v287 = vcvt.s32.f32 %v271
    %v288 = vcvt.s32.f32 %v272
    %v289 = vcvt.s32.f32 %v273
    %290 = vmatprep.subr.mxu0 0.0
    %291 = vmatpush1.msra.mxu0 %v207
    %292 = vmatprep.subr.mxu0 0.0
    %293 = vmatpush1.msra.mxu0 %v208
    %294 = vmatprep.subr.mxu0 0.0
    %295 = vmatpush1.msra.mxu0 %v209
    %296 = vmatprep.subr.mxu0 0.0
    %297 = vmatpush1.msra.mxu0 %v210
    %298 = vmatprep.subr.mxu0 0.0
    %299 = vmatpush1.msra.mxu0 %v211
    %300 = vmatprep.subr.mxu0 0.0
    %301 = vmatpush1.msra.mxu0 %v212
    %302 = vmatprep.subr.mxu0 0.0
    %303 = vmatpush1.msra.mxu0 %v213
    %304 = vmatprep.subr.mxu0 0.0
    %305 = vmatpush1.msra.mxu0 %v214
    %306 = vmatprep.subr.mxu0 0.0
    %307 = vmatpush1.msra.mxu0 %v215
    %308 = vmatprep.subr.mxu0 0.0
    %309 = vmatpush1.msra.mxu0 %v216
    %310 = vmatprep.subr.mxu0 0.0
    %311 = vmatpush1.msra.mxu0 %v217
    %312 = vmatprep.subr.mxu0 0.0
    %313 = vmatpush1.msra.mxu0 %v218
    %314 = vmatprep.subr.mxu0 0.0
    %315 = vmatpush1.msra.mxu0 %v219
    %316 = vmatprep.subr.mxu0 0.0
    %317 = vmatpush1.msra.mxu0 %v220
    %318 = vmatprep.subr.mxu0 0.0
    %319 = vmatpush1.msra.mxu0 %v221
    %320 = vmatprep.subr.mxu0 0.0
    %321 = vmatpush1.msra.mxu0 %v222
    %322 = vmatprep.subr.mxu0 0.0
    %323 = vmatpush1.msra.mxu0 0.0
    %324 = vmatprep.subr.mxu0 0.0
    %325 = vmatpush1.msra.mxu0 0.0
    %326 = vmatprep.subr.mxu0 0.0
    %327 = vmatpush1.msra.mxu0 0.0
    %328 = vmatprep.subr.mxu0 0.0
    %329 = vmatpush1.msra.mxu0 0.0
    %330 = vmatprep.subr.mxu0 0.0
    %331 = vmatpush1.msra.mxu0 0.0
    %332 = vmatprep.subr.mxu0 0.0
    %333 = vmatpush1.msra.mxu0 0.0
    %334 = vmatprep.subr.mxu0 0.0
    %335 = vmatpush1.msra.mxu0 0.0
    %336 = vmatprep.subr.mxu0 0.0
    %337 = vmatpush1.msra.mxu0 0.0
    %338 = vmatprep.subr.mxu0 0.0
    %339 = vmatpush1.msra.mxu0 0.0
    %340 = vmatprep.subr.mxu0 0.0
    %341 = vmatpush1.msra.mxu0 0.0
    %342 = vmatprep.subr.mxu0 0.0
    %343 = vmatpush1.msra.mxu0 0.0
    %344 = vmatprep.subr.mxu0 0.0
    %345 = vmatpush1.msra.mxu0 0.0
    %346 = vmatprep.subr.mxu0 0.0
    %347 = vmatpush1.msra.mxu0 0.0
    %348 = vmatprep.subr.mxu0 0.0
    %349 = vmatpush1.msra.mxu0 0.0
    %350 = vmatprep.subr.mxu0 0.0
    %351 = vmatpush1.msra.mxu0 0.0
    %352 = vmatprep.subr.mxu0 0.0
    %353 = vmatpush1.msra.mxu0 0.0
    %354 = vmatprep.mubr.f32.mxu0 0.0
    %355 = vmatmul.mubr.f32.gmra.mrb[0].mxu0 %v274
    %v356 = vpop.f32.mrb[0].mxu0
    %v357 = vadd.f32 0.0, %v356
    %v358 = vpop.f32.mrb[0].mxu0
    %359 = vmatprep.mubr.f32.mxu0 0.0
    %360 = vmatmul.mubr.f32.gmra.mrb[0].mxu0 %v275
    %v361 = vpop.f32.mrb[0].mxu0
    %v362 = vadd.f32 0.0, %v361
    %v363 = vpop.f32.mrb[0].mxu0
    %364 = vmatprep.mubr.f32.mxu0 0.0
    %365 = vmatmul.mubr.f32.gmra.mrb[0].mxu0 %v276
    %v366 = vpop.f32.mrb[0].mxu0
    %v367 = vadd.f32 0.0, %v366
    %v368 = vpop.f32.mrb[0].mxu0
    %369 = vmatprep.mubr.f32.mxu0 0.0
    %370 = vmatmul.mubr.f32.gmra.mrb[0].mxu0 %v277
    %v371 = vpop.f32.mrb[0].mxu0
    %v372 = vadd.f32 0.0, %v371
    %v373 = vpop.f32.mrb[0].mxu0
    %374 = vmatprep.mubr.f32.mxu0 0.0
    %375 = vmatmul.mubr.f32.gmra.mrb[0].mxu0 %v278
    %v376 = vpop.f32.mrb[0].mxu0
    %v377 = vadd.f32 0.0, %v376
    %v378 = vpop.f32.mrb[0].mxu0
    %379 = vmatprep.mubr.f32.mxu0 0.0
    %380 = vmatmul.mubr.f32.gmra.mrb[0].mxu0 %v279
    %v381 = vpop.f32.mrb[0].mxu0
    %v382 = vadd.f32 0.0, %v381
    %v383 = vpop.f32.mrb[0].mxu0
    %384 = vmatprep.mubr.f32.mxu0 0.0
    %385 = vmatmul.mubr.f32.gmra.mrb[0].mxu0 %v280
    %v386 = vpop.f32.mrb[0].mxu0
    %v387 = vadd.f32 0.0, %v386
    %v388 = vpop.f32.mrb[0].mxu0
    %389 = vmatprep.mubr.f32.mxu0 0.0
    %390 = vmatmul.mubr.f32.gmra.mrb[0].mxu0 %v281
    %v391 = vpop.f32.mrb[0].mxu0
    %v392 = vadd.f32 0.0, %v391
    %v393 = vpop.f32.mrb[0].mxu0
    %394 = vmatprep.mubr.f32.mxu0 0.0
    %395 = vmatmul.mubr.f32.gmra.mrb[0].mxu0 %v282
    %v396 = vpop.f32.mrb[0].mxu0
    %v397 = vadd.f32 0.0, %v396
    %v398 = vpop.f32.mrb[0].mxu0
    %399 = vmatprep.mubr.f32.mxu0 0.0
    %400 = vmatmul.mubr.f32.gmra.mrb[0].mxu0 %v283
    %v401 = vpop.f32.mrb[0].mxu0
    %v402 = vadd.f32 0.0, %v401
    %v403 = vpop.f32.mrb[0].mxu0
    %404 = vmatprep.mubr.f32.mxu0 0.0
    %405 = vmatmul.mubr.f32.gmra.mrb[0].mxu0 %v284
    %v406 = vpop.f32.mrb[0].mxu0
    %v407 = vadd.f32 0.0, %v406
    %v408 = vpop.f32.mrb[0].mxu0
    %409 = vmatprep.mubr.f32.mxu0 0.0
    %410 = vmatmul.mubr.f32.gmra.mrb[0].mxu0 %v285
    %v411 = vpop.f32.mrb[0].mxu0
    %v412 = vadd.f32 0.0, %v411
    %v413 = vpop.f32.mrb[0].mxu0
    %414 = vmatprep.mubr.f32.mxu0 0.0
    %415 = vmatmul.mubr.f32.gmra.mrb[0].mxu0 %v286
    %v416 = vpop.f32.mrb[0].mxu0
    %v417 = vadd.f32 0.0, %v416
    %v418 = vpop.f32.mrb[0].mxu0
    %419 = vmatprep.mubr.f32.mxu0 0.0
    %420 = vmatmul.mubr.f32.gmra.mrb[0].mxu0 %v287
    %v421 = vpop.f32.mrb[0].mxu0
    %v422 = vadd.f32 0.0, %v421
    %v423 = vpop.f32.mrb[0].mxu0
    %424 = vmatprep.mubr.f32.mxu0 0.0
    %425 = vmatmul.mubr.f32.gmra.mrb[0].mxu0 %v288
    %v426 = vpop.f32.mrb[0].mxu0
    %v427 = vadd.f32 0.0, %v426
    %v428 = vpop.f32.mrb[0].mxu0
    %429 = vmatprep.mubr.f32.mxu0 0.0
    %430 = vmatmul.mubr.f32.gmra.mrb[0].mxu0 %v289
    %v431 = vpop.f32.mrb[0].mxu0
    %v432 = vadd.f32 0.0, %v431
    %v433 = vpop.f32.mrb[0].mxu0
    %434 = vdwg.mxu0
    %v435 = vld [vmem:[%s3] sm:$0x1]
    %v437 = vlaneseq
    %v438 = vshrl.u32 %v437, 7
    %v439 = vsub.s32 0, %v438
    %v440 = vrot.slane %v435, %v439
    %vm442 = vcmp.lt.f32.partialorder %v357, %v440
    %vm443 = vcmp.lt.f32.partialorder %v362, %v440
    %vm444 = vcmp.lt.f32.partialorder %v367, %v440
    %vm445 = vcmp.lt.f32.partialorder %v372, %v440
    %vm446 = vcmp.lt.f32.partialorder %v377, %v440
    %vm447 = vcmp.lt.f32.partialorder %v382, %v440
    %vm448 = vcmp.lt.f32.partialorder %v387, %v440
    %vm449 = vcmp.lt.f32.partialorder %v392, %v440
    %vm450 = vcmp.lt.f32.partialorder %v397, %v440
    %vm451 = vcmp.lt.f32.partialorder %v402, %v440
    %vm452 = vcmp.lt.f32.partialorder %v407, %v440
    %vm453 = vcmp.lt.f32.partialorder %v412, %v440
    %vm454 = vcmp.lt.f32.partialorder %v417, %v440
    %vm455 = vcmp.lt.f32.partialorder %v422, %v440
    %vm456 = vcmp.lt.f32.partialorder %v427, %v440
    %vm457 = vcmp.lt.f32.partialorder %v432, %v440
    %v458 = vsel %vm442, 1, 0
    %v459 = vsel %vm443, 1, 0
    %v460 = vsel %vm444, 1, 0
    %v461 = vsel %vm445, 1, 0
    %v462 = vsel %vm446, 1, 0
    %v463 = vsel %vm447, 1, 0
    %v464 = vsel %vm448, 1, 0
    %v465 = vsel %vm449, 1, 0
    %v466 = vsel %vm450, 1, 0
    %v467 = vsel %vm451, 1, 0
    %v468 = vsel %vm452, 1, 0
    %v469 = vsel %vm453, 1, 0
    %v470 = vsel %vm454, 1, 0
    %v471 = vsel %vm455, 1, 0
    %v472 = vsel %vm456, 1, 0
    %v473 = vsel %vm457, 1, 0
    %v474 = vcvt.s32.f32 %v458
    %v475 = vcvt.s32.f32 %v459
    %v476 = vcvt.s32.f32 %v460
    %v477 = vcvt.s32.f32 %v461
    %v478 = vcvt.s32.f32 %v462
    %v479 = vcvt.s32.f32 %v463
    %v480 = vcvt.s32.f32 %v464
    %v481 = vcvt.s32.f32 %v465
    %v482 = vcvt.s32.f32 %v466
    %v483 = vcvt.s32.f32 %v467
    %v484 = vcvt.s32.f32 %v468
    %v485 = vcvt.s32.f32 %v469
    %v486 = vcvt.s32.f32 %v470
    %v487 = vcvt.s32.f32 %v471
    %v488 = vcvt.s32.f32 %v472
    %v489 = vcvt.s32.f32 %v473
    %vm490 = vcmask 130048
    %v491 = vsel %vm490, %v474, 0.0
    %v492 = vsel %vm490, %v475, 0.0
    %v493 = vadd.f32 %v491, %v492
    %v494 = vsel %vm490, %v476, 0.0
    %v495 = vadd.f32 %v493, %v494
    %v496 = vsel %vm490, %v477, 0.0
    %v497 = vadd.f32 %v495, %v496
    %v498 = vsel %vm490, %v478, 0.0
    %v499 = vadd.f32 %v497, %v498
    %v500 = vsel %vm490, %v479, 0.0
    %v501 = vadd.f32 %v499, %v500
    %v502 = vsel %vm490, %v480, 0.0
    %v503 = vadd.f32 %v501, %v502
    %v504 = vsel %vm490, %v481, 0.0
    %v505 = vadd.f32 %v503, %v504
    %v506 = vsel %vm490, %v482, 0.0
    %v507 = vadd.f32 %v505, %v506
    %v508 = vsel %vm490, %v483, 0.0
    %v509 = vadd.f32 %v507, %v508
    %v510 = vsel %vm490, %v484, 0.0
    %v511 = vadd.f32 %v509, %v510
    %v512 = vsel %vm490, %v485, 0.0
    %v513 = vadd.f32 %v511, %v512
    %v514 = vsel %vm490, %v486, 0.0
    %v515 = vadd.f32 %v513, %v514
    %v516 = vsel %vm490, %v487, 0.0
    %v517 = vadd.f32 %v515, %v516
    %v518 = vsel %vm490, %v488, 0.0
    %v519 = vadd.f32 %v517, %v518
    %v520 = vsel %vm490, %v489, 0.0
    %v521 = vadd.f32 %v519, %v520
    %v522 = vrot.slane %v521, 4
    %v523 = vadd.f32 %v521, %v522
    %v524 = vrot.slane %v523, 2
    %v525 = vadd.f32 %v523, %v524
    %v526 = vrot.slane %v525, 1
    %v527 = vadd.f32 %v525, %v526
    %v528 = vcvt.f32.s32.to.zero.pseudo %v527
    %vm529 = vcmp.lt.s32.totalorder %v528, 15
    %v530 = vsel %vm529, %v528, 15
    %vm531 = vcmp.eq.s32.totalorder %v224, %v530
    %vm532 = vcmp.eq.s32.totalorder %v225, %v530
    %vm533 = vcmp.eq.s32.totalorder %v226, %v530
    %vm534 = vcmp.eq.s32.totalorder %v227, %v530
    %vm535 = vcmp.eq.s32.totalorder %v228, %v530
    %vm536 = vcmp.eq.s32.totalorder %v229, %v530
    %vm537 = vcmp.eq.s32.totalorder %v230, %v530
    %vm538 = vcmp.eq.s32.totalorder %v231, %v530
    %vm539 = vcmp.eq.s32.totalorder %v232, %v530
    %vm540 = vcmp.eq.s32.totalorder %v233, %v530
    %vm541 = vcmp.eq.s32.totalorder %v234, %v530
    %vm542 = vcmp.eq.s32.totalorder %v235, %v530
    %vm543 = vcmp.eq.s32.totalorder %v236, %v530
    %vm544 = vcmp.eq.s32.totalorder %v237, %v530
    %vm545 = vcmp.eq.s32.totalorder %v238, %v530
    %vm546 = vcmp.eq.s32.totalorder %v239, %v530
    %v547 = vsel %vm531, %v207, 0.0
    %v548 = vsel %vm532, %v208, 0.0
    %v549 = vsel %vm533, %v209, 0.0
    %v550 = vsel %vm534, %v210, 0.0
    %v551 = vsel %vm535, %v211, 0.0
    %v552 = vsel %vm536, %v212, 0.0
    %v553 = vsel %vm537, %v213, 0.0
    %v554 = vsel %vm538, %v214, 0.0
    %v555 = vsel %vm539, %v215, 0.0
    %v556 = vsel %vm540, %v216, 0.0
    %v557 = vsel %vm541, %v217, 0.0
    %v558 = vsel %vm542, %v218, 0.0
    %v559 = vsel %vm543, %v219, 0.0
    %v560 = vsel %vm544, %v220, 0.0
    %v561 = vsel %vm545, %v221, 0.0
    %v562 = vsel %vm546, %v222, 0.0
    %v563 = vsel %vm490, %v547, 0.0
    %v564 = vsel %vm490, %v548, 0.0
    %v565 = vadd.f32 %v563, %v564
    %v566 = vsel %vm490, %v549, 0.0
    %v567 = vadd.f32 %v565, %v566
    %v568 = vsel %vm490, %v550, 0.0
    %v569 = vadd.f32 %v567, %v568
    %v570 = vsel %vm490, %v551, 0.0
    %v571 = vadd.f32 %v569, %v570
    %v572 = vsel %vm490, %v552, 0.0
    %v573 = vadd.f32 %v571, %v572
    %v574 = vsel %vm490, %v553, 0.0
    %v575 = vadd.f32 %v573, %v574
    %v576 = vsel %vm490, %v554, 0.0
    %v577 = vadd.f32 %v575, %v576
    %v578 = vsel %vm490, %v555, 0.0
    %v579 = vadd.f32 %v577, %v578
    %v580 = vsel %vm490, %v556, 0.0
    %v581 = vadd.f32 %v579, %v580
    %v582 = vsel %vm490, %v557, 0.0
    %v583 = vadd.f32 %v581, %v582
    %v584 = vsel %vm490, %v558, 0.0
    %v585 = vadd.f32 %v583, %v584
    %v586 = vsel %vm490, %v559, 0.0
    %v587 = vadd.f32 %v585, %v586
    %v588 = vsel %vm490, %v560, 0.0
    %v589 = vadd.f32 %v587, %v588
    %v590 = vsel %vm490, %v561, 0.0
    %v591 = vadd.f32 %v589, %v590
    %v592 = vsel %vm490, %v562, 0.0
    %v593 = vadd.f32 %v591, %v592
    %v594 = vrot.slane %v593, 4
    %v595 = vadd.f32 %v593, %v594
    %v596 = vrot.slane %v595, 2
    %v597 = vadd.f32 %v595, %v596
    %v598 = vrot.slane %v597, 1
    %v599 = vadd.f32 %v597, %v598
    %v600 = vlog2.pop %v599
    %v601 = vmul.f32 %v600, 0.6931472
    %vm602 = vcmask 122880
    %603 = vst.msk [vmem:[#allocation8] sm:$0x1] %vm602, %v530
    %604 = vst.msk [vmem:[#allocation10] sm:$0x1] %vm602, %v601
    // Predicated region
    $region26: #{tpu_custom_call.1} parent=1 // pred_check
      _
    $region27: #{tpu_custom_call.1} parent=1 // pred_check_branch
      %606 = sbr.rel (0) target = $region29
    $region28: #{tpu_custom_call.1} parent=1 // pred_region
      %s608 = ssub.s32 256, 256
      %609 = vsyncadd [#allocation4], %s608
      %s610 = sshll.u32 [#allocation7], 4
      %s611 = int_to_ptr.vmem [resolvable:$true] %s610
      %616 = dma.vmem_to_hbm [thread:$0]  %s611, 256, %s4, [#allocation4], 128, 128, 8
    $region29: #{tpu_custom_call.1} parent=1 // pred_fallthru
      _
    // Predicated region
    $region30: #{tpu_custom_call.1} parent=1 // pred_check
      _
    $region31: #{tpu_custom_call.1} parent=1 // pred_check_branch
      %618 = sbr.rel (0) target = $region33
    $region32: #{tpu_custom_call.1} parent=1 // pred_region
      %s620 = ssub.s32 16, 16
      %621 = vsyncadd [#allocation9], %s620
      %s623 = sshll.u32 [#allocation8], 4
      %s624 = int_to_ptr.vmem [resolvable:$true] %s623
      %626 = dma.vmem_to_hbm [thread:$0]  %s624, 16, %s5, [#allocation9]
    $region33: #{tpu_custom_call.1} parent=1 // pred_fallthru
      _
    // Predicated region
    $region34: #{tpu_custom_call.1} parent=1 // pred_check
      _
    $region35: #{tpu_custom_call.1} parent=1 // pred_check_branch
      %628 = sbr.rel (0) target = $region37
    $region36: #{tpu_custom_call.1} parent=1 // pred_region
      %s630 = ssub.s32 16, 16
      %631 = vsyncadd [#allocation9], %s630
      %s633 = sshll.u32 [#allocation10], 4
      %s634 = int_to_ptr.vmem [resolvable:$true] %s633
      %636 = dma.vmem_to_hbm [thread:$0]  %s634, 16, %s6, [#allocation9]
    $region37: #{tpu_custom_call.1} parent=1 // pred_fallthru
      _
    // Predicated region
    $region38: #{tpu_custom_call.1} parent=1 // pred_check
      _
    $region39: #{tpu_custom_call.1} parent=1 // pred_check_branch
      %638 = sbr.rel (0) target = $region41
    $region40: #{tpu_custom_call.1} parent=1 // pred_region
      %639 = dma.done [#allocation4], 256
    $region41: #{tpu_custom_call.1} parent=1 // pred_fallthru
      _
    // Predicated region
    $region42: #{tpu_custom_call.1} parent=1 // pred_check
      _
    $region43: #{tpu_custom_call.1} parent=1 // pred_check_branch
      %641 = sbr.rel (0) target = $region45
    $region44: #{tpu_custom_call.1} parent=1 // pred_region
      %642 = dma.done [#allocation9], 16
    $region45: #{tpu_custom_call.1} parent=1 // pred_fallthru
      _
    // Predicated region
    $region46: #{tpu_custom_call.1} parent=1 // pred_check
      _
    $region47: #{tpu_custom_call.1} parent=1 // pred_check_branch
      %644 = sbr.rel (0) target = $region49
    $region48: #{tpu_custom_call.1} parent=1 // pred_region
      %645 = dma.done [#allocation9], 16
    $region49: #{tpu_custom_call.1} parent=1 // pred_fallthru
      _
    %646 = vsyncpa [#allocation3], 1
    %647 = vsyncpa [#allocation6], 1
    %648 = vsyncpa [#allocation4], 1
    %649 = vsyncpa [#allocation9], 1

</llo_original>
